<compile_context>
chip_gen: v6e
topology: v6e:2x2x1
jax: 0.10.0
libtpu: 0.0.40
codegen_flags: <defaults>
</compile_context>

<pallas_src>
import jax
import jax.numpy as jnp
from jax.experimental import pallas as pl
from jax.experimental.pallas import tpu as pltpu


def _round_up(n, m):
    return ((n + m - 1) // m) * m


def _refiner_kernel(x_ref, w_ref, base_ref, y_ref):
    # x_ref:    [TB, F] feature tile (native dtype)
    # w_ref:    [8,  F] fused (leaf_weight * tree_weight) vector, replicated rows
    # base_ref: [1]     base score scalar (SMEM)
    # y_ref:    [1, TB] lane-dense output tile
    x = x_ref[...]
    w = w_ref[...]
    if x.dtype != w.dtype:          # trace-time branch; only for non-float inputs
        x = x.astype(w.dtype)
    # (8, F) . (TB, F)^T on the MXU with f32 accumulation -> (8, TB); all rows
    # identical, row 0 is the answer.  Frees the XLU/VPU (no cross-lane reduce).
    acc = jax.lax.dot_general(
        w, x,
        dimension_numbers=(((1,), (1,)), ((), ())),
        preferred_element_type=jnp.float32)
    y_ref[...] = acc[0:1, :] + base_ref[0]


def lr_plus_l1_forward(x, leaf_weights_flat, tree_weights_per_feature, base_score):
    """Pallas implementation of LRPlusL1Refiner.forward.

    x:                          [B, F] features (concatenated leaf one-hot slots)
    leaf_weights_flat:          [F]    concatenated per-tree leaf weights
    tree_weights_per_feature:   [F]    tree_weights[i] broadcast over tree i's slots
    base_score:                 scalar
    returns:                    [B]
    """
    B, F = x.shape
    itemsize = jnp.dtype(x.dtype).itemsize

    # Fuse the two weight vectors once per call (constant across grid steps).
    # Feed bf16 natively to the MXU when x is bf16, else keep f32.
    w = (leaf_weights_flat.astype(jnp.float32)
         * tree_weights_per_feature.astype(jnp.float32))
    w_dtype = jnp.bfloat16 if x.dtype == jnp.bfloat16 else jnp.float32
    w8 = jnp.broadcast_to(w.astype(w_dtype).reshape(1, F), (8, F))

    # Batch tile: aim for ~8 MiB per x buffer, floor of 8 rows (sublane min,
    # covers very large F), cap of 8192 rows (bounds the (8, TB) result size).
    row_bytes = max(F * itemsize, 1)
    TB = (8 * 1024 * 1024) // row_bytes
    TB = max(8, min(8192, (TB // 8) * 8))
    TB = min(TB, _round_up(B, 8))
    nb = -(-B // TB)  # ceil-div, Python int
    # TODO(synk): for F so large that even an 8-row tile exceeds VMEM, add a
    # second ("arbitrary") grid axis over the feature dim with a VMEM accumulator.

    base = jnp.asarray(base_score, jnp.float32).reshape(1)

    # VMEM budget: double-buffered x tile + weights + lane-dense out + headroom.
    # (The weight block index is constant; its second pipeline buffer is wasted
    # VMEM but negligible — pl.Buffered(1) could reclaim it if needed.)
    vmem_bytes = (2 * TB * F * itemsize
                  + 2 * 8 * _round_up(F, 128) * jnp.dtype(w_dtype).itemsize
                  + 2 * 8 * TB * 4
                  + (2 << 20))
    vmem_limit = int(min(max(vmem_bytes, 8 << 20), 64 << 20))

    cost = pl.CostEstimate(
        flops=2 * B * F,
        transcendentals=0,
        bytes_accessed=B * F * itemsize + 8 * F * 4 + B * 4,
    )

    y = pl.pallas_call(
        _refiner_kernel,
        out_shape=jax.ShapeDtypeStruct((nb, TB), jnp.float32),
        grid=(nb,),
        in_specs=[
            pl.BlockSpec((TB, F), lambda i: (i, 0)),              # streamed x tiles
            pl.BlockSpec((8, F), lambda i: (0, 0)),               # resident fused weights
            pl.BlockSpec(memory_space=pltpu.MemorySpace.SMEM),    # base score scalar
        ],
        out_specs=pl.BlockSpec((1, TB), lambda i: (i, 0)),        # lane-dense output
        compiler_params=pltpu.CompilerParams(
            dimension_semantics=("parallel",),
            vmem_limit_bytes=vmem_limit),
        cost_estimate=cost,
    )(x, w8, base)
    return y.reshape(-1)[:B]


if __name__ == "__main__":
    key = jax.random.PRNGKey(0)
    k_x, k_leaf = jax.random.split(key)

    # Synthetic "additive tree" structure: 4 trees with these leaf counts.
    leaves_per_tree = [8, 16, 4, 4]
    n_trees = len(leaves_per_tree)
    F = sum(leaves_per_tree)          # total feature dim = 32
    B = 8                             # batch size

    # Deterministic parameter init (set_params analogue).
    leaf_weights = [
        jax.random.normal(jax.random.fold_in(k_leaf, i), (n,), dtype=jnp.float32)
        for i, n in enumerate(leaves_per_tree)
    ]
    leaf_weights_flat = jnp.concatenate(leaf_weights)                     # [F]
    tree_weights = jnp.ones((n_trees,), dtype=jnp.float32)                # init = 1
    tree_weights_per_feature = jnp.concatenate(
        [jnp.full((n,), tree_weights[i], dtype=jnp.float32)
         for i, n in enumerate(leaves_per_tree)]
    )                                                                     # [F]
    base_score = jnp.float32(0.5)

    # Example input.
    x = jax.random.normal(k_x, (B, F), dtype=jnp.float32)

    y = lr_plus_l1_forward(x, leaf_weights_flat, tree_weights_per_feature, base_score)
    y = jax.block_until_ready(y)

    # Pure-JAX reference (mirrors the PyTorch per-tree loop exactly).
    offset = 0
    y_ref = jnp.zeros((B,), jnp.float32)
    for i, n in enumerate(leaves_per_tree):
        y_ref = y_ref + x[:, offset:offset + n] @ leaf_weights[i] * tree_weights[i]
        offset += n
    y_ref = y_ref + base_score

    assert y.shape == (B,)
    assert jnp.allclose(y, y_ref, atol=1e-5, rtol=1e-5)

    # TODO(synk): refine()/psgd()/create_mini_batches (Adam + proximal-L1 update
    # loop over minibatches) is host-side training logic and intentionally not
    # implemented as a kernel.
    print("KERNEL_OK")
</pallas_src>

<mosaic_0001>
module attributes {stable_mosaic.version = 11 : i64} {
  func.func @_refiner_kernel(%arg0: i32, %arg1: memref<8x32xf32, #tpu.memory_space<vmem>>, %arg2: memref<8x32xf32, #tpu.memory_space<vmem>>, %arg3: memref<1xf32, #tpu.memory_space<smem>>, %arg4: memref<1x8xf32, #tpu.memory_space<vmem>>) attributes {dimension_semantics = [#tpu.dimension_semantics<parallel>], iteration_bounds = array<i64: 1>, scalar_prefetch = 0 : i64, scratch_operands = 0 : i64, tpu.core_type = #tpu.core_type<tc>, window_params = [{transform_indices = @transform_0, window_bounds = array<i64: 8, 32>}, {pipeline_mode = #tpu.pipeline_mode<synchronous>, transform_indices = @transform_1, window_bounds = array<i64: 8, 32>}, {transform_indices = @transform_2, window_bounds = array<i64: 1>}, {transform_indices = @transform_3, window_bounds = array<i64: 1, 8>}]} {
    %c0 = arith.constant 0 : index
    %c0_0 = arith.constant 0 : index
    %0 = vector.load %arg1[%c0, %c0_0] : memref<8x32xf32, #tpu.memory_space<vmem>>, vector<8x32xf32>
    %c0_1 = arith.constant 0 : index
    %c0_2 = arith.constant 0 : index
    %1 = vector.load %arg2[%c0_1, %c0_2] : memref<8x32xf32, #tpu.memory_space<vmem>>, vector<8x32xf32>
    %cst = arith.constant dense<0.000000e+00> : vector<8x8xf32>
    %2 = tpu.matmul %1, %0, %cst {dimension_numbers = #tpu.dot_dimension_numbers<[1], [1], [0], [0], [0, 0, 1, 0], [], []>} : vector<8x32xf32>, vector<8x32xf32>, vector<8x8xf32> -> vector<8x8xf32>
    %3 = vector.extract_strided_slice %2 {offsets = [0, 0], sizes = [1, 8], strides = [1, 1]} : vector<8x8xf32> to vector<1x8xf32>
    %c0_3 = arith.constant 0 : index
    %4 = memref.load %arg3[%c0_3] : memref<1xf32, #tpu.memory_space<smem>>
    %5 = vector.broadcast %4 : f32 to vector<1x8xf32>
    %6 = arith.addf %3, %5 : vector<1x8xf32>
    %c0_4 = arith.constant 0 : index
    %c0_5 = arith.constant 0 : index
    %7 = vector.load %arg4[%c0_4, %c0_5] : memref<1x8xf32, #tpu.memory_space<vmem>>, vector<1x8xf32>
    tpu.vector_store %arg4[%c0_4, %c0_5], %6 {strides = array<i32>} : memref<1x8xf32, #tpu.memory_space<vmem>>, vector<1x8xf32>,
    return
  }
  func.func @transform_0(%arg0: i32) -> (i32, i32) {
    %c0_i32 = arith.constant 0 : i32
    %c0_i32_0 = arith.constant 0 : i32
    return %arg0, %c0_i32 : i32, i32
  }
  func.func @transform_1(%arg0: i32) -> (i32, i32) {
    %c0_i32 = arith.constant 0 : i32
    %c0_i32_0 = arith.constant 0 : i32
    %c0_i32_1 = arith.constant 0 : i32
    return %c0_i32, %c0_i32_0 : i32, i32
  }
  func.func @transform_2(%arg0: i32) -> i32 {
    %c0_i32 = arith.constant 0 : i32
    %c0_i32_0 = arith.constant 0 : i32
    return %c0_i32 : i32
  }
  func.func @transform_3(%arg0: i32) -> (i32, i32) {
    %c0_i32 = arith.constant 0 : i32
    %c0_i32_0 = arith.constant 0 : i32
    return %arg0, %c0_i32 : i32, i32
  }
}

</mosaic_0001>

<llo_original>
// kernel: tpu_custom_call.1
$region0: #{tpu_custom_call.1}
  #allocation0 [shape = 'u32[]', space=smem, size = 0x4, offset = 0x4, fixed_abs, tag = 'smem constant byte address 0x4 - core index']
  #allocation1 [shape = 'u32[144,128]{1,0:T(1,128)}', space=vmem, size = 0x12000, scoped, tag = 'internal scratch']
  #allocation2 [shape = 'f32[1]{0:T(128)S(6)}', space=smem, size = 0x200, scoped, tag = 'scoped memory for tpu_custom_call.1']
  %s0 = inlined_call_operand.hbm [shape: f32[8,32], index: 0, kind: input, shape index: {}]
  %s1 = inlined_call_operand.hbm [shape: f32[8,32], index: 1, kind: input, shape index: {}]
  %s2 = inlined_call_operand.<no memory space> [shape: f32[1], index: 2, kind: input, shape index: {}]
  %s3 = inlined_call_operand.hbm [shape: f32[1,8], index: 3, kind: output, shape index: {}]
  %s4 = sld [smem:[#allocation0]]
  $region30: #{tpu_custom_call.1} parent=0
    _
  %s6 = ssub.s32 1, %s4
  %s7 = scalar_select 0, %s6, %s4
  %8 = sst [smem:[#allocation2]] %s2
  $region1: #{tpu_custom_call.1} parent=0
    #allocation3 [shape = 'u8[4096]{0}', space=vmem, size = 0x1000, scoped, tag = 'input window, operand 0, single buffered']
    #allocation4 [shape = 's32[1]{0}', space=sflag, size = 0x4, scoped, tag = 'scoped memory for tpu_custom_call.1']
    #allocation5 [shape = 's32[1]{0}', space=sflag, size = 0x4, scoped, tag = 'scoped memory for tpu_custom_call.1']
    #allocation6 [shape = 'u8[4096]{0}', space=vmem, size = 0x1000, scoped, tag = 'input window, operand 1, single buffered']
    #allocation7 [shape = 's32[1]{0}', space=sflag, size = 0x4, scoped, tag = 'scoped memory for tpu_custom_call.1']
    #allocation8 [shape = 'u8[512]{0}', space=vmem, size = 0x400, scoped, tag = 'output window, operand 0, single buffered']
    %9 = vsyncpa [#allocation4], 0
    %10 = vsyncpa [#allocation7], 0
    %11 = vsyncpa [#allocation5], 0
    // Predicated region
    $region2: #{tpu_custom_call.1} parent=1 // pred_check
      _
    $region3: #{tpu_custom_call.1} parent=1 // pred_check_branch
      %13 = sbr.rel (0) target = $region5
    $region4: #{tpu_custom_call.1} parent=1 // pred_region
      %s15 = ssub.s32 128, 128
      %16 = vsyncadd [#allocation4], %s15
      %s18 = sshll.u32 [#allocation3], 4
      %s19 = int_to_ptr.vmem [resolvable:$true] %s18
      %21 = dma.hbm_to_vmem [thread:$0]  %s0, 128, %s19, [#allocation4]
    $region5: #{tpu_custom_call.1} parent=1 // pred_fallthru
      _
    // Predicated region
    $region6: #{tpu_custom_call.1} parent=1 // pred_check
      _
    $region7: #{tpu_custom_call.1} parent=1 // pred_check_branch
      %23 = sbr.rel (0) target = $region9
    $region8: #{tpu_custom_call.1} parent=1 // pred_region
      %s25 = ssub.s32 128, 128
      %26 = vsyncadd [#allocation7], %s25
      %s28 = sshll.u32 [#allocation6], 4
      %s29 = int_to_ptr.vmem [resolvable:$true] %s28
      %31 = dma.hbm_to_vmem [thread:$0]  %s1, 128, %s29, [#allocation7]
    $region9: #{tpu_custom_call.1} parent=1 // pred_fallthru
      _
    // Predicated region
    $region10: #{tpu_custom_call.1} parent=1 // pred_check
      _
    $region11: #{tpu_custom_call.1} parent=1 // pred_check_branch
      %33 = sbr.rel (0) target = $region13
    $region12: #{tpu_custom_call.1} parent=1 // pred_region
      _
    $region13: #{tpu_custom_call.1} parent=1 // pred_fallthru
      _
    // Predicated region
    $region14: #{tpu_custom_call.1} parent=1 // pred_check
      _
    $region15: #{tpu_custom_call.1} parent=1 // pred_check_branch
      %35 = sbr.rel (0) target = $region17
    $region16: #{tpu_custom_call.1} parent=1 // pred_region
      %36 = dma.done [#allocation4], 128
    $region17: #{tpu_custom_call.1} parent=1 // pred_fallthru
      _
    // Predicated region
    $region18: #{tpu_custom_call.1} parent=1 // pred_check
      _
    $region19: #{tpu_custom_call.1} parent=1 // pred_check_branch
      %38 = sbr.rel (0) target = $region21
    $region20: #{tpu_custom_call.1} parent=1 // pred_region
      %39 = dma.done [#allocation7], 128
    $region21: #{tpu_custom_call.1} parent=1 // pred_fallthru
      _
    %v40 = vld [vmem:[#allocation3] sm:$0xff]
    %v41 = vld [vmem:[#allocation6] sm:$0xff]
    %vm42 = vcmask 261120
    %v44 = vsel %vm42, %v41, 0
    %v47 = vsel %vm42, %v40, 0
    %49 = vmatprep.subr.mxu0 0.0
    %50 = vmatpush1.xpose.msra.mxu0 0.0
    %51 = vmatprep.subr.mxu0 0.0
    %52 = vmatpush1.xpose.msra.mxu0 0.0
    %53 = vmatprep.subr.mxu0 0.0
    %54 = vmatpush1.xpose.msra.mxu0 0.0
    %55 = vmatprep.subr.mxu0 0.0
    %56 = vmatpush1.xpose.msra.mxu0 0.0
    %57 = vmatprep.subr.mxu0 0.0
    %58 = vmatpush1.xpose.msra.mxu0 0.0
    %59 = vmatprep.subr.mxu0 0.0
    %60 = vmatpush1.xpose.msra.mxu0 0.0
    %61 = vmatprep.subr.mxu0 0.0
    %62 = vmatpush1.xpose.msra.mxu0 0.0
    %63 = vmatprep.subr.mxu0 0.0
    %64 = vmatpush1.xpose.msra.mxu0 0.0
    %65 = vmatprep.subr.mxu0 0.0
    %66 = vmatpush1.xpose.msra.mxu0 0.0
    %67 = vmatprep.subr.mxu0 0.0
    %68 = vmatpush1.xpose.msra.mxu0 0.0
    %69 = vmatprep.subr.mxu0 0.0
    %70 = vmatpush1.xpose.msra.mxu0 0.0
    %71 = vmatprep.subr.mxu0 0.0
    %72 = vmatpush1.xpose.msra.mxu0 0.0
    %73 = vmatprep.subr.mxu0 0.0
    %74 = vmatpush1.xpose.msra.mxu0 0.0
    %75 = vmatprep.subr.mxu0 0.0
    %76 = vmatpush1.xpose.msra.mxu0 0.0
    %77 = vmatprep.subr.mxu0 0.0
    %78 = vmatpush1.xpose.msra.mxu0 0.0
    %79 = vmatprep.subr.mxu0 0.0
    %80 = vmatpush1.xpose.msra.mxu0 %v47
    %81 = vmatprep.subr.mxu0 0.0
    %82 = vmatpush2.xpose.msra.mxu0 0.0
    %83 = vmatprep.subr.mxu0 0.0
    %84 = vmatpush2.xpose.msra.mxu0 0.0
    %85 = vmatprep.subr.mxu0 0.0
    %86 = vmatpush2.xpose.msra.mxu0 0.0
    %87 = vmatprep.subr.mxu0 0.0
    %88 = vmatpush2.xpose.msra.mxu0 0.0
    %89 = vmatprep.subr.mxu0 0.0
    %90 = vmatpush2.xpose.msra.mxu0 0.0
    %91 = vmatprep.subr.mxu0 0.0
    %92 = vmatpush2.xpose.msra.mxu0 0.0
    %93 = vmatprep.subr.mxu0 0.0
    %94 = vmatpush2.xpose.msra.mxu0 0.0
    %95 = vmatprep.subr.mxu0 0.0
    %96 = vmatpush2.xpose.msra.mxu0 0.0
    %97 = vmatprep.subr.mxu0 0.0
    %98 = vmatpush2.xpose.msra.mxu0 0.0
    %99 = vmatprep.subr.mxu0 0.0
    %100 = vmatpush2.xpose.msra.mxu0 0.0
    %101 = vmatprep.subr.mxu0 0.0
    %102 = vmatpush2.xpose.msra.mxu0 0.0
    %103 = vmatprep.subr.mxu0 0.0
    %104 = vmatpush2.xpose.msra.mxu0 0.0
    %105 = vmatprep.subr.mxu0 0.0
    %106 = vmatpush2.xpose.msra.mxu0 0.0
    %107 = vmatprep.subr.mxu0 0.0
    %108 = vmatpush2.xpose.msra.mxu0 0.0
    %109 = vmatprep.subr.mxu0 0.0
    %110 = vmatpush2.xpose.msra.mxu0 0.0
    %111 = vmatprep.subr.mxu0 0.0
    %112 = vmatpush2.xpose.msra.mxu0 0.0
    %113 = vmatprep.mubr.f32.mxu0 0.0
    %114 = vmatmul.mubr.f32.gmra.mxu0 %v44
    %v115 = vpop.f32.mrf.mxu0
    %v116 = vadd.f32 0.0, %v115
    %v117 = vpop.f32.mrf.mxu0
    %118 = vdwg.mxu0
    %s119 = sld [smem:[#allocation2]]
    %v120 = vstv %s119
    %v121 = vadd.f32 %v116, %v120
    %vm122 = vcmask 57344
    %123 = vst.msk [vmem:[#allocation8] sm:$0x1] %vm122, %v121
    // Predicated region
    $region22: #{tpu_custom_call.1} parent=1 // pred_check
      _
    $region23: #{tpu_custom_call.1} parent=1 // pred_check_branch
      %125 = sbr.rel (0) target = $region25
    $region24: #{tpu_custom_call.1} parent=1 // pred_region
      %s127 = ssub.s32 16, 16
      %128 = vsyncadd [#allocation5], %s127
      %s130 = sshll.u32 [#allocation8], 4
      %s131 = int_to_ptr.vmem [resolvable:$true] %s130
      %133 = dma.vmem_to_hbm [thread:$0]  %s131, 16, %s3, [#allocation5]
    $region25: #{tpu_custom_call.1} parent=1 // pred_fallthru
      _
    // Predicated region
    $region26: #{tpu_custom_call.1} parent=1 // pred_check
      _
    $region27: #{tpu_custom_call.1} parent=1 // pred_check_branch
      %135 = sbr.rel (0) target = $region29
    $region28: #{tpu_custom_call.1} parent=1 // pred_region
      %136 = dma.done [#allocation5], 16
    $region29: #{tpu_custom_call.1} parent=1 // pred_fallthru
      _
    %137 = vsyncpa [#allocation4], 1
    %138 = vsyncpa [#allocation7], 1
    %139 = vsyncpa [#allocation5], 1

</llo_original>
